<compile_context>
chip_gen: v7x
topology: tpu7x:2x2x1
jax: 0.10.0
libtpu: 0.0.40
codegen_flags: <defaults>
</compile_context>

<pallas_src>
import functools
import math

import jax
import jax.numpy as jnp
from jax import lax
from jax.experimental import pallas as pl
from jax.experimental.pallas import tpu as pltpu


def _round_up(v, m):
    return ((v + m - 1) // m) * m


def _round_down(v, m):
    return (v // m) * m


def _tpu_budget():
    """Returns (block_bytes_per_buffer, vmem_limit_bytes, tensorcores_per_chip)."""
    vmem = 64 * 1024 * 1024          # conservative default (v7x per-TC VMEM)
    cores = 1
    try:
        info = pltpu.get_tpu_info()
        v = getattr(info, "vmem_capacity_bytes", None)
        if isinstance(v, int) and v > 0:
            vmem = v
        for attr in ("num_cores", "num_tensorcores", "tensorcore_count",
                     "cores_per_chip"):
            c = getattr(info, attr, None)
            if isinstance(c, int) and c > 0:
                cores = c
                break
    except Exception:
        pass
    # ~12 MiB/buffer on 128 MiB chips (v5e/v6e), 8 MiB/buffer on 64 MiB v7x.
    block_bytes = min(12 * 1024 * 1024, vmem // 8)
    # Explicit scoped-VMEM limit: 96 MiB on v5e/v6e, 48 MiB on v7x.
    vmem_limit = min((vmem * 3) // 4, 96 * 1024 * 1024)
    return block_bytes, vmem_limit, cores


def _cparams(sems, vmem_limit):
    return pltpu.CompilerParams(dimension_semantics=sems,
                                vmem_limit_bytes=vmem_limit)


# --------------------------------------------------------------------------
# Kernels
# --------------------------------------------------------------------------
def _mean_axis1_direct_kernel(x_ref, o_ref, *, inv_d):
    # Whole reduced axis (axis 1 of the block) is resident: direct reduce.
    # NOTE (load-bearing): ragged blocks along the other axes contain garbage
    # from out-of-bounds reads, but that garbage only lands in output
    # positions that are themselves out-of-bounds and masked on store.  Do
    # not change this kernel to accumulate across other grid axes.
    xv = x_ref[...].astype(jnp.float32)
    o_ref[...] = (jnp.sum(xv, axis=1, keepdims=True) * inv_d).astype(o_ref.dtype)


def _mean_axis1_acc_kernel(x_ref, o_ref, acc_ref, *, d, td):
    # Non-trailing reduction with the reduced (sublane) axis split across the
    # last ("arbitrary") grid axis; f32 VMEM accumulator of shape (1, 1, tn).
    k = pl.program_id(2)
    nk = pl.num_programs(2)

    @pl.when(k == 0)
    def _():
        acc_ref[...] = jnp.zeros_like(acc_ref)

    def accumulate(masked):
        xv = x_ref[...].astype(jnp.float32)
        if masked:
            rows = lax.broadcasted_iota(jnp.int32, xv.shape, 1)
            xv = jnp.where(rows < (d % td), xv, 0.0)
        acc_ref[...] += jnp.sum(xv, axis=1, keepdims=True)

    if d % td == 0:
        accumulate(False)
    else:
        # Only the final reduced-axis block is ragged: keep iota+cmp+select
        # off the hot path.
        @pl.when(k < nk - 1)
        def _():
            accumulate(False)

        @pl.when(k == nk - 1)
        def _():
            accumulate(True)

    @pl.when(k == nk - 1)
    def _():
        o_ref[...] = (acc_ref[...] * (1.0 / d)).astype(o_ref.dtype)


def _mean_lane_acc_kernel(x_ref, o_ref, acc_ref, *, d, td):
    # Trailing (lane-axis) reduction with the reduced axis split across grid
    # axis 1.  Per-step work: vreg-aligned chunk adds into a (tm, 128) f32
    # accumulator (VALU/vld only).  The single cross-lane XLU reduce and the
    # 1/d scale happen only in the finalize step.
    k = pl.program_id(1)
    nk = pl.num_programs(1)
    nchunk = td // 128

    @pl.when(k == 0)
    def _():
        acc_ref[...] = jnp.zeros_like(acc_ref)

    def fold(src):
        out = src[:, 0:128].astype(jnp.float32)
        for c in range(1, nchunk):
            out = out + src[:, c * 128:(c + 1) * 128].astype(jnp.float32)
        return out

    if d % td == 0:
        acc_ref[...] += fold(x_ref)
    else:
        @pl.when(k < nk - 1)
        def _():
            acc_ref[...] += fold(x_ref)

        @pl.when(k == nk - 1)
        def _():
            xv = x_ref[...].astype(jnp.float32)
            cols = lax.broadcasted_iota(jnp.int32, xv.shape, 1)
            xv = jnp.where(cols < (d % td), xv, 0.0)
            acc_ref[...] += fold(xv)

    @pl.when(k == nk - 1)
    def _():
        s = jnp.sum(acc_ref[...], axis=1, keepdims=True)
        o_ref[...] = (s * (1.0 / d)).astype(o_ref.dtype)


# --------------------------------------------------------------------------
# Wrapper
# --------------------------------------------------------------------------
def mean_pallas(x, dim=0, keepdim=False):
    """Pallas TPU equivalent of torch.mean(x, dim=dim, keepdim=keepdim)."""
    ndim = x.ndim
    dim = dim % ndim
    shape = x.shape
    d = int(shape[dim])
    pre = int(math.prod(shape[:dim]))
    post = int(math.prod(shape[dim + 1:]))
    itemsize = jnp.dtype(x.dtype).itemsize

    # torch.mean rejects integer inputs; here we promote them to f32 output.
    out_dtype = x.dtype if jnp.issubdtype(x.dtype, jnp.floating) else jnp.float32

    block_bytes, vmem_limit, cores = _tpu_budget()
    sm = max(8, 32 // itemsize)       # dtype sublane multiple: 8 f32 / 16 bf16 / 32 int8

    if post > 1:
        # Non-trailing reduction axis: free reshape to (pre, d, post); the
        # reduced axis lands on the sublane axis of the block.
        x3 = x.reshape(pre, d, post)
        d_pad = _round_up(d, sm)
        post_pad = _round_up(post, 128)

        if d_pad * 128 * itemsize <= block_bytes:
            # Whole reduced axis resident per block -> direct kernel, no scratch.
            lane_budget = _round_down(block_bytes // (d_pad * itemsize), 128)
            tn = min(post_pad, lane_budget)
            if tn >= post:
                tn = post
            tn_pad = _round_up(tn, 128)
            # Fold multiple `pre` rows per step to amortize per-step overhead.
            bp = min(max(block_bytes // (d_pad * tn_pad * itemsize), 1), pre)
            # Keep >= `cores` parallel grid steps only on multi-TC chips (v7x).
            if cores >= 2 and pl.cdiv(pre, bp) * pl.cdiv(post, tn) < cores:
                if pre >= cores:
                    bp = pl.cdiv(pre, cores)
                elif post > 128:
                    tn = _round_up(pl.cdiv(post, cores), 128)
            grid = (pl.cdiv(pre, bp), pl.cdiv(post, tn))
            out_flat = pl.pallas_call(
                functools.partial(_mean_axis1_direct_kernel, inv_d=1.0 / d),
                out_shape=jax.ShapeDtypeStruct((pre, 1, post), out_dtype),
                grid=grid,
                in_specs=[pl.BlockSpec((bp, d, tn), lambda i, j: (i, 0, j))],
                out_specs=pl.BlockSpec((bp, 1, tn), lambda i, j: (i, 0, j)),
                compiler_params=_cparams(("parallel", "parallel"), vmem_limit),
            )(x3)
        else:
            # Very long reduced axis: split it across an "arbitrary" grid
            # axis with an f32 VMEM accumulator.
            tn = post if post <= 128 else min(_round_down(post, 128), 1024)
            tn_pad = _round_up(tn, 128)
            td = max(_round_down(block_bytes // (tn_pad * itemsize), sm), sm)
            grid = (pre, pl.cdiv(post, tn), pl.cdiv(d, td))
            out_flat = pl.pallas_call(
                functools.partial(_mean_axis1_acc_kernel, d=d, td=td),
                out_shape=jax.ShapeDtypeStruct((pre, 1, post), out_dtype),
                grid=grid,
                in_specs=[pl.BlockSpec((1, td, tn), lambda i, j, k: (i, k, j))],
                out_specs=pl.BlockSpec((1, 1, tn), lambda i, j, k: (i, 0, j)),
                scratch_shapes=[pltpu.VMEM((1, 1, tn), jnp.float32)],
                compiler_params=_cparams(("parallel", "parallel", "arbitrary"),
                                         vmem_limit),
            )(x3)
    else:
        # Trailing reduction axis: free reshape to (pre, d); the reduced axis
        # is the lane axis of the block.
        x2 = x.reshape(pre, d)
        d_lane_pad = _round_up(d, 128)

        if d_lane_pad * sm * itemsize <= block_bytes:
            # Whole reduced axis resident per block -> direct kernel.
            rows_budget = block_bytes // (d_lane_pad * itemsize)
            tm = pre if pre <= rows_budget else max(_round_down(rows_budget, sm), sm)
            if cores >= 2 and pre >= 2 * sm and pl.cdiv(pre, tm) < cores:
                tm = _round_up(pl.cdiv(pre, cores), sm)
            grid = (pl.cdiv(pre, tm),)
            out_flat = pl.pallas_call(
                functools.partial(_mean_axis1_direct_kernel, inv_d=1.0 / d),
                out_shape=jax.ShapeDtypeStruct((pre, 1), out_dtype),
                grid=grid,
                in_specs=[pl.BlockSpec((tm, d), lambda i: (i, 0))],
                out_specs=pl.BlockSpec((tm, 1), lambda i: (i, 0)),
                compiler_params=_cparams(("parallel",), vmem_limit),
            )(x2)
        else:
            # Extremely long trailing axis: split it across an "arbitrary"
            # axis; (tm, 128) deferred accumulator.
            tm = pre if pre <= 256 else 256            # 256 % {8,16,32} == 0
            lane_budget = _round_down(block_bytes // (max(tm, sm) * itemsize), 128)
            td = max(min(lane_budget, 4096), 128)      # <= 32 unrolled chunk adds
            grid = (pl.cdiv(pre, tm), pl.cdiv(d, td))
            out_flat = pl.pallas_call(
                functools.partial(_mean_lane_acc_kernel, d=d, td=td),
                out_shape=jax.ShapeDtypeStruct((pre, 1), out_dtype),
                grid=grid,
                in_specs=[pl.BlockSpec((tm, td), lambda i, k: (i, k))],
                out_specs=pl.BlockSpec((tm, 1), lambda i, k: (i, 0)),
                scratch_shapes=[pltpu.VMEM((tm, 128), jnp.float32)],
                compiler_params=_cparams(("parallel", "arbitrary"), vmem_limit),
            )(x2)

    if keepdim:
        out_shape = shape[:dim] + (1,) + shape[dim + 1:]
    else:
        out_shape = shape[:dim] + shape[dim + 1:]
    return out_flat.reshape(out_shape)


if __name__ == "__main__":
    key = jax.random.PRNGKey(0)
    # NCHW-style input, small shapes: batch=2, channels=4, spatial=16x16.
    x = jax.random.normal(key, (2, 4, 16, 16), dtype=jnp.float32)

    # Module defaults: dim=0, keepdim=False.
    y = jax.block_until_ready(mean_pallas(x, dim=0, keepdim=False))
    y_ref = jnp.mean(x, axis=0)
    assert y.shape == y_ref.shape, (y.shape, y_ref.shape)
    assert jnp.allclose(y, y_ref, atol=1e-5, rtol=1e-5)

    # Lane-reduction (trailing dim) path.
    y1 = jax.block_until_ready(mean_pallas(x, dim=-1, keepdim=False))
    assert jnp.allclose(y1, jnp.mean(x, axis=-1), atol=1e-5, rtol=1e-5)

    # keepdim path.
    y2 = jax.block_until_ready(mean_pallas(x, dim=1, keepdim=True))
    assert jnp.allclose(y2, jnp.mean(x, axis=1, keepdims=True), atol=1e-5, rtol=1e-5)

    # Multi-pre-row (bp > 1) sublane path with post < 128.
    x4 = jax.random.normal(jax.random.PRNGKey(1), (8, 2, 4, 4), dtype=jnp.float32)
    y3 = jax.block_until_ready(mean_pallas(x4, dim=1, keepdim=False))
    assert jnp.allclose(y3, jnp.mean(x4, axis=1), atol=1e-5, rtol=1e-5)

    print("KERNEL_OK")
</pallas_src>

<mosaic_0001>
module attributes {stable_mosaic.version = 11 : i64} {
  func.func @_mean_axis1_direct_kernel(%arg0: i32, %arg1: i32, %arg2: memref<1x2x1024xf32, #tpu.memory_space<vmem>>, %arg3: memref<1x1x1024xf32, #tpu.memory_space<vmem>>) attributes {dimension_semantics = [#tpu.dimension_semantics<parallel>, #tpu.dimension_semantics<parallel>], iteration_bounds = array<i64: 1, 1>, scalar_prefetch = 0 : i64, scratch_operands = 0 : i64, tpu.core_type = #tpu.core_type<tc>, window_params = [{transform_indices = @transform_0, window_bounds = array<i64: 1, 2, 1024>}, {transform_indices = @transform_1, window_bounds = array<i64: 1, 1, 1024>}]} {
    %c0 = arith.constant 0 : index
    %c0_0 = arith.constant 0 : index
    %c0_1 = arith.constant 0 : index
    %0 = vector.load %arg2[%c0, %c0_0, %c0_1] : memref<1x2x1024xf32, #tpu.memory_space<vmem>>, vector<1x2x1024xf32>
    %cst = arith.constant dense<0.000000e+00> : vector<1x1024xf32>
    %1 = vector.multi_reduction <add>, %0, %cst [1] : vector<1x2x1024xf32> to vector<1x1024xf32>
    %2 = vector.shape_cast %1 : vector<1x1024xf32> to vector<1x1x1024xf32>
    %cst_2 = arith.constant 5.000000e-01 : f32
    %3 = vector.broadcast %cst_2 : f32 to vector<1x1x1024xf32>
    %4 = arith.mulf %2, %3 : vector<1x1x1024xf32>
    %c0_3 = arith.constant 0 : index
    %c0_4 = arith.constant 0 : index
    %c0_5 = arith.constant 0 : index
    %5 = vector.load %arg3[%c0_3, %c0_4, %c0_5] : memref<1x1x1024xf32, #tpu.memory_space<vmem>>, vector<1x1x1024xf32>
    tpu.vector_store %arg3[%c0_3, %c0_4, %c0_5], %4 {strides = array<i32>} : memref<1x1x1024xf32, #tpu.memory_space<vmem>>, vector<1x1x1024xf32>,
    return
  }
  func.func @transform_0(%arg0: i32, %arg1: i32) -> (i32, i32, i32) {
    %c0_i32 = arith.constant 0 : i32
    %c0_i32_0 = arith.constant 0 : i32
    return %arg0, %c0_i32, %arg1 : i32, i32, i32
  }
  func.func @transform_1(%arg0: i32, %arg1: i32) -> (i32, i32, i32) {
    %c0_i32 = arith.constant 0 : i32
    %c0_i32_0 = arith.constant 0 : i32
    return %arg0, %c0_i32, %arg1 : i32, i32, i32
  }
}

</mosaic_0001>

<llo_original>
// kernel: tpu_custom_call.1
$region0: #{tpu_custom_call.1}
  #allocation0 [shape = 'u32[]', space=smem, size = 0x4, offset = 0x4, fixed_abs, tag = 'smem constant byte address 0x4 - core index']
  #allocation1 [shape = 'u32[144,128]{1,0:T(1,128)}', space=vmem, size = 0x12000, scoped, tag = 'internal scratch']
  %s0 = inlined_call_operand.hbm [shape: f32[1,2,1024], index: 0, kind: input, shape index: {}]
  %s1 = inlined_call_operand.hbm [shape: f32[1,1,1024], index: 1, kind: output, shape index: {}]
  %s2 = sld [smem:[#allocation0]]
  $region18: #{tpu_custom_call.1} parent=0
    _
  %s4 = ssub.s32 1, %s2
  %s5 = scalar_select 0, %s4, %s2
  $region1: #{tpu_custom_call.1} parent=0
    #allocation2 [shape = 'u8[8192]{0}', space=vmem, size = 0x2000, scoped, tag = 'input window, operand 0, single buffered']
    #allocation3 [shape = 's32[1]{0}', space=sflag, size = 0x4, scoped, tag = 'scoped memory for tpu_custom_call.1']
    #allocation4 [shape = 's32[1]{0}', space=sflag, size = 0x4, scoped, tag = 'scoped memory for tpu_custom_call.1']
    #allocation5 [shape = 'u8[4096]{0}', space=vmem, size = 0x1000, scoped, tag = 'output window, operand 0, single buffered']
    %6 = vsyncpa [#allocation3], 0
    %7 = vsyncpa [#allocation4], 0
    // Predicated region
    $region2: #{tpu_custom_call.1} parent=1 // pred_check
      _
    $region3: #{tpu_custom_call.1} parent=1 // pred_check_branch
      %9 = sbr.rel (0) target = $region5
    $region4: #{tpu_custom_call.1} parent=1 // pred_region
      %s11 = ssub.s32 256, 256
      %12 = vsyncadd [#allocation3], %s11
      %s14 = sshll.u32 [#allocation2], 4
      %s15 = int_to_ptr.vmem [resolvable:$true] %s14
      %17 = dma.hbm_to_vmem [thread:$0]  %s0, 256, %s15, [#allocation3]
    $region5: #{tpu_custom_call.1} parent=1 // pred_fallthru
      _
    // Predicated region
    $region6: #{tpu_custom_call.1} parent=1 // pred_check
      _
    $region7: #{tpu_custom_call.1} parent=1 // pred_check_branch
      %19 = sbr.rel (0) target = $region9
    $region8: #{tpu_custom_call.1} parent=1 // pred_region
      %20 = dma.done [#allocation3], 256
    $region9: #{tpu_custom_call.1} parent=1 // pred_fallthru
      _
    %v21 = vld [vmem:[#allocation2] sm:$0xff]
    %v22 = vld [vmem:[#allocation2 + $0x8] sm:$0xff]
    %v25 = vcombine.high %v21, %v21
    %v27 = vunpack.c.l.s4 1983009808
    %v28 = vunpack.c.0.s8 %v27
    %v29 = vlaneseq
    %v30 = vshrl.u32 %v29, 7
    %v31 = vsub.s32 %v28, %v30
    %v32 = vrot.slane %v21, %v31
    %v34 = vunpack.c.l.s4 1983009808
    %v35 = vunpack.c.0.s8 %v34
    %v36 = vlaneseq
    %v37 = vshrl.u32 %v36, 7
    %v38 = vsub.s32 %v35, %v37
    %v39 = vrot.slane %v25, %v38
    %v40 = vcombine.high %v32, %v32
    %v41 = vcombine.high %v39, %v39
    %v42 = vcombine.high %v22, %v22
    %v44 = vunpack.c.l.s4 1983009808
    %v45 = vunpack.c.0.s8 %v44
    %v46 = vlaneseq
    %v47 = vshrl.u32 %v46, 7
    %v48 = vsub.s32 %v45, %v47
    %v49 = vrot.slane %v22, %v48
    %v51 = vunpack.c.l.s4 1983009808
    %v52 = vunpack.c.0.s8 %v51
    %v53 = vlaneseq
    %v54 = vshrl.u32 %v53, 7
    %v55 = vsub.s32 %v52, %v54
    %v56 = vrot.slane %v42, %v55
    %v57 = vcombine.high %v49, %v49
    %v58 = vcombine.high %v56, %v56
    %vm67 = vcmask 1041408
    %v68 = vsel %vm67, %v32, 0.0
    %v69 = vrot.slane %v68, 4
    %v70 = vadd.f32 %v68, %v69
    %v71 = vrot.slane %v70, 2
    %v72 = vadd.f32 %v70, %v71
    %v73 = vrot.slane %v72, 1
    %v74 = vadd.f32 %v72, %v73
    %v75 = vsel %vm67, %v40, 0.0
    %v76 = vrot.slane %v75, 4
    %v77 = vadd.f32 %v75, %v76
    %v78 = vrot.slane %v77, 2
    %v79 = vadd.f32 %v77, %v78
    %v80 = vrot.slane %v79, 1
    %v81 = vadd.f32 %v79, %v80
    %v82 = vsel %vm67, %v39, 0.0
    %v83 = vrot.slane %v82, 4
    %v84 = vadd.f32 %v82, %v83
    %v85 = vrot.slane %v84, 2
    %v86 = vadd.f32 %v84, %v85
    %v87 = vrot.slane %v86, 1
    %v88 = vadd.f32 %v86, %v87
    %v89 = vsel %vm67, %v41, 0.0
    %v90 = vrot.slane %v89, 4
    %v91 = vadd.f32 %v89, %v90
    %v92 = vrot.slane %v91, 2
    %v93 = vadd.f32 %v91, %v92
    %v94 = vrot.slane %v93, 1
    %v95 = vadd.f32 %v93, %v94
    %v96 = vsel %vm67, %v49, 0.0
    %v97 = vrot.slane %v96, 4
    %v98 = vadd.f32 %v96, %v97
    %v99 = vrot.slane %v98, 2
    %v100 = vadd.f32 %v98, %v99
    %v101 = vrot.slane %v100, 1
    %v102 = vadd.f32 %v100, %v101
    %v103 = vsel %vm67, %v57, 0.0
    %v104 = vrot.slane %v103, 4
    %v105 = vadd.f32 %v103, %v104
    %v106 = vrot.slane %v105, 2
    %v107 = vadd.f32 %v105, %v106
    %v108 = vrot.slane %v107, 1
    %v109 = vadd.f32 %v107, %v108
    %v110 = vsel %vm67, %v56, 0.0
    %v111 = vrot.slane %v110, 4
    %v112 = vadd.f32 %v110, %v111
    %v113 = vrot.slane %v112, 2
    %v114 = vadd.f32 %v112, %v113
    %v115 = vrot.slane %v114, 1
    %v116 = vadd.f32 %v114, %v115
    %v117 = vsel %vm67, %v58, 0.0
    %v118 = vrot.slane %v117, 4
    %v119 = vadd.f32 %v117, %v118
    %v120 = vrot.slane %v119, 2
    %v121 = vadd.f32 %v119, %v120
    %v122 = vrot.slane %v121, 1
    %v123 = vadd.f32 %v121, %v122
    %v124 = vmul.f32 %v74, 0.5
    %v125 = vmul.f32 %v81, 0.5
    %v126 = vmul.f32 %v88, 0.5
    %v127 = vmul.f32 %v95, 0.5
    %v128 = vmul.f32 %v102, 0.5
    %v129 = vmul.f32 %v109, 0.5
    %v130 = vmul.f32 %v116, 0.5
    %v131 = vmul.f32 %v123, 0.5
    %v140 = vcombine.low %v124, %v125
    %v141 = vcombine.low %v126, %v127
    %v142 = vcombine.low %v128, %v129
    %v143 = vcombine.low %v130, %v131
    %v145 = vunpack.c.l.s4 1966171168
    %v146 = vunpack.c.0.s8 %v145
    %v147 = vlaneseq
    %v148 = vshrl.u32 %v147, 7
    %v149 = vsub.s32 %v146, %v148
    %v150 = vrot.slane %v140, %v149
    %v152 = vunpack.c.l.s4 1966171168
    %v153 = vunpack.c.0.s8 %v152
    %v154 = vlaneseq
    %v155 = vshrl.u32 %v154, 7
    %v156 = vsub.s32 %v153, %v155
    %v157 = vrot.slane %v141, %v156
    %v159 = vunpack.c.l.s4 1966171168
    %v160 = vunpack.c.0.s8 %v159
    %v161 = vlaneseq
    %v162 = vshrl.u32 %v161, 7
    %v163 = vsub.s32 %v160, %v162
    %v164 = vrot.slane %v142, %v163
    %v166 = vunpack.c.l.s4 1966171168
    %v167 = vunpack.c.0.s8 %v166
    %v168 = vlaneseq
    %v169 = vshrl.u32 %v168, 7
    %v170 = vsub.s32 %v167, %v169
    %v171 = vrot.slane %v143, %v170
    %v172 = vcombine.low %v150, %v157
    %v173 = vcombine.low %v164, %v171
    %v175 = vunpack.c.l.s4 1966171168
    %v176 = vunpack.c.0.s8 %v175
    %v177 = vlaneseq
    %v178 = vshrl.u32 %v177, 7
    %v179 = vsub.s32 %v176, %v178
    %v180 = vrot.slane %v172, %v179
    %v182 = vunpack.c.l.s4 1966171168
    %v183 = vunpack.c.0.s8 %v182
    %v184 = vlaneseq
    %v185 = vshrl.u32 %v184, 7
    %v186 = vsub.s32 %v183, %v185
    %v187 = vrot.slane %v173, %v186
    %v188 = vcombine.low %v180, %v187
    %190 = vst [vmem:[#allocation5] sm:$0xff] %v188
    // Predicated region
    $region10: #{tpu_custom_call.1} parent=1 // pred_check
      _
    $region11: #{tpu_custom_call.1} parent=1 // pred_check_branch
      %192 = sbr.rel (0) target = $region13
    $region12: #{tpu_custom_call.1} parent=1 // pred_region
      %s194 = ssub.s32 128, 128
      %195 = vsyncadd [#allocation4], %s194
      %s197 = sshll.u32 [#allocation5], 4
      %s198 = int_to_ptr.vmem [resolvable:$true] %s197
      %200 = dma.vmem_to_hbm [thread:$0]  %s198, 128, %s1, [#allocation4]
    $region13: #{tpu_custom_call.1} parent=1 // pred_fallthru
      _
    // Predicated region
    $region14: #{tpu_custom_call.1} parent=1 // pred_check
      _
    $region15: #{tpu_custom_call.1} parent=1 // pred_check_branch
      %202 = sbr.rel (0) target = $region17
    $region16: #{tpu_custom_call.1} parent=1 // pred_region
      %203 = dma.done [#allocation4], 128
    $region17: #{tpu_custom_call.1} parent=1 // pred_fallthru
      _
    %204 = vsyncpa [#allocation3], 1
    %205 = vsyncpa [#allocation4], 1

</llo_original>
